<compile_context>
chip_gen: v7x
topology: tpu7x:2x2x1
jax: 0.10.0
libtpu: 0.0.40
codegen_flags: <defaults>
</compile_context>

<pallas_src>
import jax
import jax.numpy as jnp
from jax import lax
from jax.experimental import pallas as pl
from jax.experimental.pallas import tpu as pltpu


def _round_up(x, m):
    return (x + m - 1) // m * m


def _cdiv(a, b):
    return -(-a // b)


def _critic_kernel(s_ref, a_ref, w1s_ref, w1a_ref, b1_ref,
                   w2_ref, b2_ref, w3t_ref, b3_ref, o_ref):
    """One batch tile: o[0, :tb] = q1(relu(fc2(relu(fc1(cat[s, a])))))."""
    wdt = w2_ref.dtype                       # MXU input dtype (f32 or bf16 weights)
    s = s_ref[...].astype(wdt)
    a = a_ref[...].astype(wdt)

    # fc1 on the (virtually) concatenated input: state @ W1_s + action @ W1_a + b1.
    # (Splitting fc1's weight keeps the concat out of HBM; merging into one MXU pass
    # would need an in-kernel lane-concat for only a minor win here.)
    h1 = (jnp.dot(s, w1s_ref[...], preferred_element_type=jnp.float32)
          + jnp.dot(a, w1a_ref[...], preferred_element_type=jnp.float32)
          + b1_ref[...])
    h1 = jnp.maximum(h1, 0.0)

    # fc2 + ReLU (f32 accumulation on the MXU; bias/ReLU on the VPU in f32).
    h2 = jnp.dot(h1.astype(wdt), w2_ref[...],
                 preferred_element_type=jnp.float32) + b2_ref[...]
    h2 = jnp.maximum(h2, 0.0)

    # q1 head, emitted lane-dense: contract fc2 on both operands so the result is a
    # (1, tb) row (batch along lanes) -> unmasked full-width stores instead of masked
    # 1-lane stores for a (tb, 1) column.
    q_row = lax.dot_general(w3t_ref[...], h2.astype(wdt),
                            dimension_numbers=(((1,), (1,)), ((), ())),
                            preferred_element_type=jnp.float32) + b3_ref[...]
    o_ref[...] = q_row.astype(o_ref.dtype)


# Lazily probed: whether pipeline_mode=pl.Buffered(1) on the resident weights is accepted
# by the installed JAX / Mosaic.  (Only relevant for eager use; under an outer jit the
# probe simply runs once at trace time.)
_SINGLE_BUFFER_WEIGHTS_OK = None


def critic_forward(state, action, params, *, block_b=512, min_grid_steps=2):
    """Pallas-fused CriticNetwork forward.

    state:  (B, input_dims)  f32 or bf16
    action: (B, n_actions)   f32 or bf16
    params: dict from `prepare_params` with
        w1_s (input_dims, fc1p), w1_a (n_actions, fc1p), b1 (1, fc1p),
        w2 (fc1p, fc2p), b2 (1, fc2p), w3t (1, fc2p), b3 (1, 1)
      weights may be f32 or bf16; biases f32.  fc1p/fc2p are the (possibly 128-padded)
      feature dims.
    block_b:        max batch-tile rows (sweep 256/512/1024).
    min_grid_steps: keep at least this many grid steps for large batches (>=2 so the
                    "parallel" batch axis can shard across v7x's two TensorCores).
    returns q: (B, 1) f32
    """
    B, in_dims = state.shape
    Ba, n_act = action.shape
    assert Ba == B, "state/action batch mismatch"
    fc1p = params["w1_s"].shape[1]
    fc2p = params["w2"].shape[1]
    assert params["w1_a"].shape == (n_act, fc1p)
    assert params["w2"].shape[0] == fc1p, "module's forward requires fc1_dims == fc2_dims"
    assert params["w3t"].shape == (1, fc2p)
    assert params["b1"].shape == (1, fc1p) and params["b2"].shape == (1, fc2p)
    assert params["b3"].shape == (1, 1)

    # ---- batch tile selection -------------------------------------------------------
    # Multi-tile grids use 128-multiples for tb (so the lane-dense (1, tb) output block is
    # legal and sublanes stay aligned); a batch that fits one tile shrinks to round_up(B, 8).
    block_b = max(128, _round_up(int(block_b), 128))
    tb = min(block_b, _round_up(_cdiv(B, max(1, int(min_grid_steps))), 128))
    if tb >= B:
        tb = _round_up(B, 8)           # single tile covering the whole batch
    num_tiles = _cdiv(B, tb)
    out_cols = num_tiles * tb          # lane-dense output row; tail lanes discarded below

    weight_names = ("w1_s", "w1_a", "b1", "w2", "b2", "w3t", "b3")
    weight_bytes = sum(int(params[k].size) * params[k].dtype.itemsize for k in weight_names)
    stream_bytes = tb * in_dims * state.dtype.itemsize + tb * n_act * action.dtype.itemsize

    def _run(single_buffer_weights):
        use_single = single_buffer_weights and hasattr(pl, "Buffered")

        if use_single:
            # Resident weights: constant index_map, no double-buffering.
            def whole(arr):
                return pl.BlockSpec(arr.shape, lambda i: (0, 0),
                                    pipeline_mode=pl.Buffered(1))
        else:
            def whole(arr):
                return pl.BlockSpec(arr.shape, lambda i: (0, 0))

        def stream(f):
            return pl.BlockSpec((tb, f), lambda i: (i, 0))

        # Simple VMEM budget: resident weights (x buffer count) + double-buffered streamed
        # input blocks + double-buffered output row + slack.  Clamp to [32 MiB, 64 MiB] so
        # the request is safe on v7x (64 MiB VMEM) while still lifting v5e's 16 MiB default.
        wbuf = 1 if use_single else 2
        needed = (wbuf * weight_bytes + 2 * stream_bytes + 2 * tb * 4 + (4 << 20))
        vmem_limit = int(max(32 << 20, min(_round_up(needed, 1 << 20), 64 << 20)))

        return pl.pallas_call(
            _critic_kernel,
            out_shape=jax.ShapeDtypeStruct((1, out_cols), jnp.float32),
            grid=(num_tiles,),
            in_specs=[
                stream(in_dims),                 # state tile   (streamed)
                stream(n_act),                   # action tile  (streamed)
                whole(params["w1_s"]), whole(params["w1_a"]), whole(params["b1"]),
                whole(params["w2"]), whole(params["b2"]),
                whole(params["w3t"]), whole(params["b3"]),
            ],
            out_specs=pl.BlockSpec((1, tb), lambda i: (0, i)),   # lane-dense q row
            compiler_params=pltpu.CompilerParams(
                dimension_semantics=("parallel",),   # shard batch steps across TCs (v7x)
                vmem_limit_bytes=vmem_limit,
            ),
        )(state, action,
          params["w1_s"], params["w1_a"], params["b1"],
          params["w2"], params["b2"],
          params["w3t"], params["b3"])

    global _SINGLE_BUFFER_WEIGHTS_OK
    if _SINGLE_BUFFER_WEIGHTS_OK is None:
        try:
            out = jax.block_until_ready(_run(True))
            _SINGLE_BUFFER_WEIGHTS_OK = True
        except Exception:
            _SINGLE_BUFFER_WEIGHTS_OK = False
            out = _run(False)
    else:
        out = _run(_SINGLE_BUFFER_WEIGHTS_OK)

    # Drop the padded tail lanes of the ragged last tile and return PyTorch's (B, 1).
    return out[0, :B].reshape(B, 1)


def init_params(key, input_dims, n_actions, fc1_dims, fc2_dims):
    """Logical (unpadded, f32) params with PyTorch nn.Linear-style init; weights stored (in, out)."""
    def linear(k, fan_in, fan_out):
        kw, kb = jax.random.split(k)
        bound = float(fan_in) ** -0.5
        w = jax.random.uniform(kw, (fan_in, fan_out), jnp.float32, -bound, bound)
        b = jax.random.uniform(kb, (fan_out,), jnp.float32, -bound, bound)
        return w, b

    k1, k2, k3 = jax.random.split(key, 3)
    w1, b1 = linear(k1, input_dims + n_actions, fc1_dims)   # fc1(cat([state, action]))
    w2, b2 = linear(k2, fc2_dims, fc2_dims)                  # nn.Linear(fc2_dims, fc2_dims)
    w3, b3 = linear(k3, fc2_dims, 1)                         # q1
    return {"w1": w1, "b1": b1, "w2": w2, "b2": b2, "w3": w3, "b3": b3}


def prepare_params(p, input_dims, *, pad_to=128, weight_dtype=jnp.float32):
    """Kernel-ready params: split fc1 weight along the concat axis, zero-pad fc dims to
    `pad_to` multiples (mathematically exact), optionally cast weights to bf16 (biases stay f32)."""
    fc1 = p["w1"].shape[1]
    fc2 = p["w2"].shape[1]
    assert p["w2"].shape[0] == fc1, "module's forward requires fc1_dims == fc2_dims"
    fc1p = _round_up(fc1, pad_to)
    fc2p = _round_up(fc2, pad_to)

    def pad2(w, rows, cols):
        return jnp.pad(w, ((0, rows - w.shape[0]), (0, cols - w.shape[1])))

    w1 = pad2(p["w1"], p["w1"].shape[0], fc1p)
    w2 = pad2(p["w2"], fc1p, fc2p)
    w3 = pad2(p["w3"], fc2p, 1)
    b1 = jnp.pad(p["b1"], (0, fc1p - fc1)).reshape(1, fc1p)
    b2 = jnp.pad(p["b2"], (0, fc2p - fc2)).reshape(1, fc2p)
    b3 = p["b3"].reshape(1, 1)
    return {
        # split along the concat axis: rows [0, input_dims) -> state, rest -> action
        "w1_s": w1[:input_dims].astype(weight_dtype),
        "w1_a": w1[input_dims:].astype(weight_dtype),
        "b1": b1,
        "w2": w2.astype(weight_dtype),
        "b2": b2,
        "w3t": w3.T.astype(weight_dtype),   # (1, fc2p) row for the lane-dense head
        "b3": b3,
    }


def reference_forward(state, action, p):
    """Pure-JAX reference on the *unpadded* logical params (faithful to the PyTorch module)."""
    hp = jax.lax.Precision.HIGHEST
    x = jnp.concatenate([state.astype(jnp.float32), action.astype(jnp.float32)], axis=1)
    h1 = jnp.maximum(jnp.dot(x, p["w1"], precision=hp) + p["b1"], 0.0)
    h2 = jnp.maximum(jnp.dot(h1, p["w2"], precision=hp) + p["b2"], 0.0)
    return jnp.dot(h2, p["w3"], precision=hp) + p["b3"]


if __name__ == "__main__":
    # Small shapes consistent with the module (fc1_dims == fc2_dims is required by its forward).
    input_dims, n_actions = 16, 4
    fc1_dims = fc2_dims = 64

    key = jax.random.PRNGKey(0)
    kp, ks, ka, ks2, ka2 = jax.random.split(key, 5)
    logical = init_params(kp, input_dims, n_actions, fc1_dims, fc2_dims)
    params = prepare_params(logical, input_dims, pad_to=128)        # fc dims padded 64 -> 128

    # 1) Tiny batch: single tile, block shapes equal full dims.
    B = 8
    state = jax.random.normal(ks, (B, input_dims), jnp.float32)
    action = jax.random.normal(ka, (B, n_actions), jnp.float32)
    q = jax.block_until_ready(critic_forward(state, action, params))
    q_ref = reference_forward(state, action, logical)
    assert q.shape == (B, 1)
    assert jnp.allclose(q, q_ref, atol=1e-4, rtol=1e-4)

    # 2) Larger, non-multiple batch: multi-tile parallel grid, ragged last block,
    #    no wrapper-side padding, lane-dense output row.
    B2 = 300
    state2 = jax.random.normal(ks2, (B2, input_dims), jnp.float32)
    action2 = jax.random.normal(ka2, (B2, n_actions), jnp.float32)
    q2 = jax.block_until_ready(critic_forward(state2, action2, params))
    q2_ref = reference_forward(state2, action2, logical)
    assert q2.shape == (B2, 1)
    assert jnp.allclose(q2, q2_ref, atol=1e-4, rtol=1e-4)

    # 3) bf16 weights (native MXU dtype; recommended default on bandwidth-limited v5e),
    #    f32 accumulation; looser tolerance.
    params_bf16 = prepare_params(logical, input_dims, pad_to=128, weight_dtype=jnp.bfloat16)
    q3 = jax.block_until_ready(critic_forward(state2, action2, params_bf16))
    assert q3.shape == (B2, 1)
    assert jnp.allclose(q3, q2_ref, atol=1e-1, rtol=1e-1)

    # 4) bf16 state/action accepted directly (halves streamed HBM traffic when the
    #    producer already has bf16; the cast here is only to exercise that path).
    q4 = jax.block_until_ready(critic_forward(state2.astype(jnp.bfloat16),
                                              action2.astype(jnp.bfloat16), params_bf16))
    assert q4.shape == (B2, 1)
    assert jnp.allclose(q4, q2_ref, atol=1e-1, rtol=1e-1)

    print("KERNEL_OK")
</pallas_src>

<mosaic_0001>
module attributes {stable_mosaic.version = 11 : i64} {
  func.func @_critic_kernel(%arg0: i32, %arg1: memref<8x16xf32, #tpu.memory_space<vmem>>, %arg2: memref<8x4xf32, #tpu.memory_space<vmem>>, %arg3: memref<16x128xf32, #tpu.memory_space<vmem>>, %arg4: memref<4x128xf32, #tpu.memory_space<vmem>>, %arg5: memref<1x128xf32, #tpu.memory_space<vmem>>, %arg6: memref<128x128xf32, #tpu.memory_space<vmem>>, %arg7: memref<1x128xf32, #tpu.memory_space<vmem>>, %arg8: memref<1x128xf32, #tpu.memory_space<vmem>>, %arg9: memref<1x1xf32, #tpu.memory_space<vmem>>, %arg10: memref<1x8xf32, #tpu.memory_space<vmem>>) attributes {dimension_semantics = [#tpu.dimension_semantics<parallel>], iteration_bounds = array<i64: 1>, scalar_prefetch = 0 : i64, scratch_operands = 0 : i64, tpu.core_type = #tpu.core_type<tc>, window_params = [{transform_indices = @transform_0, window_bounds = array<i64: 8, 16>}, {transform_indices = @transform_1, window_bounds = array<i64: 8, 4>}, {pipeline_mode = #tpu.pipeline_mode<synchronous>, transform_indices = @transform_2, window_bounds = array<i64: 16, 128>}, {pipeline_mode = #tpu.pipeline_mode<synchronous>, transform_indices = @transform_3, window_bounds = array<i64: 4, 128>}, {pipeline_mode = #tpu.pipeline_mode<synchronous>, transform_indices = @transform_4, window_bounds = array<i64: 1, 128>}, {pipeline_mode = #tpu.pipeline_mode<synchronous>, transform_indices = @transform_5, window_bounds = array<i64: 128, 128>}, {pipeline_mode = #tpu.pipeline_mode<synchronous>, transform_indices = @transform_6, window_bounds = array<i64: 1, 128>}, {pipeline_mode = #tpu.pipeline_mode<synchronous>, transform_indices = @transform_7, window_bounds = array<i64: 1, 128>}, {pipeline_mode = #tpu.pipeline_mode<synchronous>, transform_indices = @transform_8, window_bounds = array<i64: 1, 1>}, {transform_indices = @transform_9, window_bounds = array<i64: 1, 8>}]} {
    %c0 = arith.constant 0 : index
    %c0_0 = arith.constant 0 : index
    %0 = vector.load %arg1[%c0, %c0_0] : memref<8x16xf32, #tpu.memory_space<vmem>>, vector<8x16xf32>
    %c0_1 = arith.constant 0 : index
    %c0_2 = arith.constant 0 : index
    %1 = vector.load %arg2[%c0_1, %c0_2] : memref<8x4xf32, #tpu.memory_space<vmem>>, vector<8x4xf32>
    %c0_3 = arith.constant 0 : index
    %c0_4 = arith.constant 0 : index
    %2 = vector.load %arg3[%c0_3, %c0_4] : memref<16x128xf32, #tpu.memory_space<vmem>>, vector<16x128xf32>
    %cst = arith.constant dense<0.000000e+00> : vector<8x128xf32>
    %3 = tpu.matmul %0, %2, %cst {dimension_numbers = #tpu.dot_dimension_numbers<[1], [0], [0], [1], [0, 0, 1, 1], [], []>} : vector<8x16xf32>, vector<16x128xf32>, vector<8x128xf32> -> vector<8x128xf32>
    %c0_5 = arith.constant 0 : index
    %c0_6 = arith.constant 0 : index
    %4 = vector.load %arg4[%c0_5, %c0_6] : memref<4x128xf32, #tpu.memory_space<vmem>>, vector<4x128xf32>
    %cst_7 = arith.constant dense<0.000000e+00> : vector<8x128xf32>
    %5 = tpu.matmul %1, %4, %cst_7 {dimension_numbers = #tpu.dot_dimension_numbers<[1], [0], [0], [1], [0, 0, 1, 1], [], []>} : vector<8x4xf32>, vector<4x128xf32>, vector<8x128xf32> -> vector<8x128xf32>
    %6 = arith.addf %3, %5 : vector<8x128xf32>
    %c0_8 = arith.constant 0 : index
    %c0_9 = arith.constant 0 : index
    %7 = vector.load %arg5[%c0_8, %c0_9] : memref<1x128xf32, #tpu.memory_space<vmem>>, vector<1x128xf32>
    %8 = vector.broadcast %7 : vector<1x128xf32> to vector<8x128xf32>
    %9 = arith.addf %6, %8 : vector<8x128xf32>
    %cst_10 = arith.constant 0.000000e+00 : f32
    %10 = vector.broadcast %cst_10 : f32 to vector<8x128xf32>
    %11 = arith.maximumf %9, %10 : vector<8x128xf32>
    %c0_11 = arith.constant 0 : index
    %c0_12 = arith.constant 0 : index
    %12 = vector.load %arg6[%c0_11, %c0_12] : memref<128x128xf32, #tpu.memory_space<vmem>>, vector<128x128xf32>
    %cst_13 = arith.constant dense<0.000000e+00> : vector<8x128xf32>
    %13 = tpu.matmul %11, %12, %cst_13 {dimension_numbers = #tpu.dot_dimension_numbers<[1], [0], [0], [1], [0, 0, 1, 1], [], []>} : vector<8x128xf32>, vector<128x128xf32>, vector<8x128xf32> -> vector<8x128xf32>
    %c0_14 = arith.constant 0 : index
    %c0_15 = arith.constant 0 : index
    %14 = vector.load %arg7[%c0_14, %c0_15] : memref<1x128xf32, #tpu.memory_space<vmem>>, vector<1x128xf32>
    %15 = vector.broadcast %14 : vector<1x128xf32> to vector<8x128xf32>
    %16 = arith.addf %13, %15 : vector<8x128xf32>
    %cst_16 = arith.constant 0.000000e+00 : f32
    %17 = vector.broadcast %cst_16 : f32 to vector<8x128xf32>
    %18 = arith.maximumf %16, %17 : vector<8x128xf32>
    %c0_17 = arith.constant 0 : index
    %c0_18 = arith.constant 0 : index
    %19 = vector.load %arg8[%c0_17, %c0_18] : memref<1x128xf32, #tpu.memory_space<vmem>>, vector<1x128xf32>
    %cst_19 = arith.constant dense<0.000000e+00> : vector<1x8xf32>
    %20 = tpu.matmul %19, %18, %cst_19 {dimension_numbers = #tpu.dot_dimension_numbers<[1], [1], [0], [0], [0, 0, 1, 0], [], []>} : vector<1x128xf32>, vector<8x128xf32>, vector<1x8xf32> -> vector<1x8xf32>
    %c0_20 = arith.constant 0 : index
    %c0_21 = arith.constant 0 : index
    %21 = vector.load %arg9[%c0_20, %c0_21] : memref<1x1xf32, #tpu.memory_space<vmem>>, vector<1x1xf32>
    %22 = vector.broadcast %21 : vector<1x1xf32> to vector<1x8xf32>
    %23 = arith.addf %20, %22 : vector<1x8xf32>
    %c0_22 = arith.constant 0 : index
    %c0_23 = arith.constant 0 : index
    %24 = vector.load %arg10[%c0_22, %c0_23] : memref<1x8xf32, #tpu.memory_space<vmem>>, vector<1x8xf32>
    tpu.vector_store %arg10[%c0_22, %c0_23], %23 {strides = array<i32>} : memref<1x8xf32, #tpu.memory_space<vmem>>, vector<1x8xf32>,
    return
  }
  func.func @transform_0(%arg0: i32) -> (i32, i32) {
    %c0_i32 = arith.constant 0 : i32
    %c0_i32_0 = arith.constant 0 : i32
    return %arg0, %c0_i32 : i32, i32
  }
  func.func @transform_1(%arg0: i32) -> (i32, i32) {
    %c0_i32 = arith.constant 0 : i32
    %c0_i32_0 = arith.constant 0 : i32
    return %arg0, %c0_i32 : i32, i32
  }
  func.func @transform_2(%arg0: i32) -> (i32, i32) {
    %c0_i32 = arith.constant 0 : i32
    %c0_i32_0 = arith.constant 0 : i32
    %c0_i32_1 = arith.constant 0 : i32
    return %c0_i32, %c0_i32_0 : i32, i32
  }
  func.func @transform_3(%arg0: i32) -> (i32, i32) {
    %c0_i32 = arith.constant 0 : i32
    %c0_i32_0 = arith.constant 0 : i32
    %c0_i32_1 = arith.constant 0 : i32
    return %c0_i32, %c0_i32_0 : i32, i32
  }
  func.func @transform_4(%arg0: i32) -> (i32, i32) {
    %c0_i32 = arith.constant 0 : i32
    %c0_i32_0 = arith.constant 0 : i32
    %c0_i32_1 = arith.constant 0 : i32
    return %c0_i32, %c0_i32_0 : i32, i32
  }
  func.func @transform_5(%arg0: i32) -> (i32, i32) {
    %c0_i32 = arith.constant 0 : i32
    %c0_i32_0 = arith.constant 0 : i32
    %c0_i32_1 = arith.constant 0 : i32
    return %c0_i32, %c0_i32_0 : i32, i32
  }
  func.func @transform_6(%arg0: i32) -> (i32, i32) {
    %c0_i32 = arith.constant 0 : i32
    %c0_i32_0 = arith.constant 0 : i32
    %c0_i32_1 = arith.constant 0 : i32
    return %c0_i32, %c0_i32_0 : i32, i32
  }
  func.func @transform_7(%arg0: i32) -> (i32, i32) {
    %c0_i32 = arith.constant 0 : i32
    %c0_i32_0 = arith.constant 0 : i32
    %c0_i32_1 = arith.constant 0 : i32
    return %c0_i32, %c0_i32_0 : i32, i32
  }
  func.func @transform_8(%arg0: i32) -> (i32, i32) {
    %c0_i32 = arith.constant 0 : i32
    %c0_i32_0 = arith.constant 0 : i32
    %c0_i32_1 = arith.constant 0 : i32
    return %c0_i32, %c0_i32_0 : i32, i32
  }
  func.func @transform_9(%arg0: i32) -> (i32, i32) {
    %c0_i32 = arith.constant 0 : i32
    %c0_i32_0 = arith.constant 0 : i32
    return %c0_i32, %arg0 : i32, i32
  }
}

module attributes {stable_mosaic.version = 11 : i64} {
  func.func @_critic_kernel(%arg0: i32, %arg1: memref<8x16xf32, #tpu.memory_space<vmem>>, %arg2: memref<8x4xf32, #tpu.memory_space<vmem>>, %arg3: memref<16x128xf32, #tpu.memory_space<vmem>>, %arg4: memref<4x128xf32, #tpu.memory_space<vmem>>, %arg5: memref<1x128xf32, #tpu.memory_space<vmem>>, %arg6: memref<128x128xf32, #tpu.memory_space<vmem>>, %arg7: memref<1x128xf32, #tpu.memory_space<vmem>>, %arg8: memref<1x128xf32, #tpu.memory_space<vmem>>, %arg9: memref<1x1xf32, #tpu.memory_space<vmem>>, %arg10: memref<1x8xf32, #tpu.memory_space<vmem>>) attributes {dimension_semantics = [#tpu.dimension_semantics<parallel>], iteration_bounds = array<i64: 1>, scalar_prefetch = 0 : i64, scratch_operands = 0 : i64, tpu.core_type = #tpu.core_type<tc>, window_params = [{transform_indices = @transform_0, window_bounds = array<i64: 8, 16>}, {transform_indices = @transform_1, window_bounds = array<i64: 8, 4>}, {pipeline_mode = #tpu.pipeline_mode<synchronous>, transform_indices = @transform_2, window_bounds = array<i64: 16, 128>}, {pipeline_mode = #tpu.pipeline_mode<synchronous>, transform_indices = @transform_3, window_bounds = array<i64: 4, 128>}, {pipeline_mode = #tpu.pipeline_mode<synchronous>, transform_indices = @transform_4, window_bounds = array<i64: 1, 128>}, {pipeline_mode = #tpu.pipeline_mode<synchronous>, transform_indices = @transform_5, window_bounds = array<i64: 128, 128>}, {pipeline_mode = #tpu.pipeline_mode<synchronous>, transform_indices = @transform_6, window_bounds = array<i64: 1, 128>}, {pipeline_mode = #tpu.pipeline_mode<synchronous>, transform_indices = @transform_7, window_bounds = array<i64: 1, 128>}, {pipeline_mode = #tpu.pipeline_mode<synchronous>, transform_indices = @transform_8, window_bounds = array<i64: 1, 1>}, {transform_indices = @transform_9, window_bounds = array<i64: 1, 8>}]} {
    %c0 = arith.constant 0 : index
    %c0_0 = arith.constant 0 : index
    %0 = vector.load %arg1[%c0, %c0_0] : memref<8x16xf32, #tpu.memory_space<vmem>>, vector<8x16xf32>
    %c0_1 = arith.constant 0 : index
    %c0_2 = arith.constant 0 : index
    %1 = vector.load %arg2[%c0_1, %c0_2] : memref<8x4xf32, #tpu.memory_space<vmem>>, vector<8x4xf32>
    %c0_3 = arith.constant 0 : index
    %c0_4 = arith.constant 0 : index
    %2 = vector.load %arg3[%c0_3, %c0_4] : memref<16x128xf32, #tpu.memory_space<vmem>>, vector<16x128xf32>
    %cst = arith.constant dense<0.000000e+00> : vector<8x128xf32>
    %3 = tpu.matmul %0, %2, %cst {dimension_numbers = #tpu.dot_dimension_numbers<[1], [0], [0], [1], [0, 0, 1, 1], [], []>} : vector<8x16xf32>, vector<16x128xf32>, vector<8x128xf32> -> vector<8x128xf32>
    %c0_5 = arith.constant 0 : index
    %c0_6 = arith.constant 0 : index
    %4 = vector.load %arg4[%c0_5, %c0_6] : memref<4x128xf32, #tpu.memory_space<vmem>>, vector<4x128xf32>
    %cst_7 = arith.constant dense<0.000000e+00> : vector<8x128xf32>
    %5 = tpu.matmul %1, %4, %cst_7 {dimension_numbers = #tpu.dot_dimension_numbers<[1], [0], [0], [1], [0, 0, 1, 1], [], []>} : vector<8x4xf32>, vector<4x128xf32>, vector<8x128xf32> -> vector<8x128xf32>
    %6 = arith.addf %3, %5 : vector<8x128xf32>
    %c0_8 = arith.constant 0 : index
    %c0_9 = arith.constant 0 : index
    %7 = vector.load %arg5[%c0_8, %c0_9] : memref<1x128xf32, #tpu.memory_space<vmem>>, vector<1x128xf32>
    %8 = vector.broadcast %7 : vector<1x128xf32> to vector<8x128xf32>
    %9 = arith.addf %6, %8 : vector<8x128xf32>
    %cst_10 = arith.constant 0.000000e+00 : f32
    %10 = vector.broadcast %cst_10 : f32 to vector<8x128xf32>
    %11 = arith.maximumf %9, %10 : vector<8x128xf32>
    %c0_11 = arith.constant 0 : index
    %c0_12 = arith.constant 0 : index
    %12 = vector.load %arg6[%c0_11, %c0_12] : memref<128x128xf32, #tpu.memory_space<vmem>>, vector<128x128xf32>
    %cst_13 = arith.constant dense<0.000000e+00> : vector<8x128xf32>
    %13 = tpu.matmul %11, %12, %cst_13 {dimension_numbers = #tpu.dot_dimension_numbers<[1], [0], [0], [1], [0, 0, 1, 1], [], []>} : vector<8x128xf32>, vector<128x128xf32>, vector<8x128xf32> -> vector<8x128xf32>
    %c0_14 = arith.constant 0 : index
    %c0_15 = arith.constant 0 : index
    %14 = vector.load %arg7[%c0_14, %c0_15] : memref<1x128xf32, #tpu.memory_space<vmem>>, vector<1x128xf32>
    %15 = vector.broadcast %14 : vector<1x128xf32> to vector<8x128xf32>
    %16 = arith.addf %13, %15 : vector<8x128xf32>
    %cst_16 = arith.constant 0.000000e+00 : f32
    %17 = vector.broadcast %cst_16 : f32 to vector<8x128xf32>
    %18 = arith.maximumf %16, %17 : vector<8x128xf32>
    %c0_17 = arith.constant 0 : index
    %c0_18 = arith.constant 0 : index
    %19 = vector.load %arg8[%c0_17, %c0_18] : memref<1x128xf32, #tpu.memory_space<vmem>>, vector<1x128xf32>
    %cst_19 = arith.constant dense<0.000000e+00> : vector<1x8xf32>
    %20 = tpu.matmul %19, %18, %cst_19 {dimension_numbers = #tpu.dot_dimension_numbers<[1], [1], [0], [0], [0, 0, 1, 0], [], []>} : vector<1x128xf32>, vector<8x128xf32>, vector<1x8xf32> -> vector<1x8xf32>
    %c0_20 = arith.constant 0 : index
    %c0_21 = arith.constant 0 : index
    %21 = vector.load %arg9[%c0_20, %c0_21] : memref<1x1xf32, #tpu.memory_space<vmem>>, vector<1x1xf32>
    %22 = vector.broadcast %21 : vector<1x1xf32> to vector<1x8xf32>
    %23 = arith.addf %20, %22 : vector<1x8xf32>
    %c0_22 = arith.constant 0 : index
    %c0_23 = arith.constant 0 : index
    %24 = vector.load %arg10[%c0_22, %c0_23] : memref<1x8xf32, #tpu.memory_space<vmem>>, vector<1x8xf32>
    tpu.vector_store %arg10[%c0_22, %c0_23], %23 {strides = array<i32>} : memref<1x8xf32, #tpu.memory_space<vmem>>, vector<1x8xf32>,
    return
  }
  func.func @transform_0(%arg0: i32) -> (i32, i32) {
    %c0_i32 = arith.constant 0 : i32
    %c0_i32_0 = arith.constant 0 : i32
    return %arg0, %c0_i32 : i32, i32
  }
  func.func @transform_1(%arg0: i32) -> (i32, i32) {
    %c0_i32 = arith.constant 0 : i32
    %c0_i32_0 = arith.constant 0 : i32
    return %arg0, %c0_i32 : i32, i32
  }
  func.func @transform_2(%arg0: i32) -> (i32, i32) {
    %c0_i32 = arith.constant 0 : i32
    %c0_i32_0 = arith.constant 0 : i32
    %c0_i32_1 = arith.constant 0 : i32
    return %c0_i32, %c0_i32_0 : i32, i32
  }
  func.func @transform_3(%arg0: i32) -> (i32, i32) {
    %c0_i32 = arith.constant 0 : i32
    %c0_i32_0 = arith.constant 0 : i32
    %c0_i32_1 = arith.constant 0 : i32
    return %c0_i32, %c0_i32_0 : i32, i32
  }
  func.func @transform_4(%arg0: i32) -> (i32, i32) {
    %c0_i32 = arith.constant 0 : i32
    %c0_i32_0 = arith.constant 0 : i32
    %c0_i32_1 = arith.constant 0 : i32
    return %c0_i32, %c0_i32_0 : i32, i32
  }
  func.func @transform_5(%arg0: i32) -> (i32, i32) {
    %c0_i32 = arith.constant 0 : i32
    %c0_i32_0 = arith.constant 0 : i32
    %c0_i32_1 = arith.constant 0 : i32
    return %c0_i32, %c0_i32_0 : i32, i32
  }
  func.func @transform_6(%arg0: i32) -> (i32, i32) {
    %c0_i32 = arith.constant 0 : i32
    %c0_i32_0 = arith.constant 0 : i32
    %c0_i32_1 = arith.constant 0 : i32
    return %c0_i32, %c0_i32_0 : i32, i32
  }
  func.func @transform_7(%arg0: i32) -> (i32, i32) {
    %c0_i32 = arith.constant 0 : i32
    %c0_i32_0 = arith.constant 0 : i32
    %c0_i32_1 = arith.constant 0 : i32
    return %c0_i32, %c0_i32_0 : i32, i32
  }
  func.func @transform_8(%arg0: i32) -> (i32, i32) {
    %c0_i32 = arith.constant 0 : i32
    %c0_i32_0 = arith.constant 0 : i32
    %c0_i32_1 = arith.constant 0 : i32
    return %c0_i32, %c0_i32_0 : i32, i32
  }
  func.func @transform_9(%arg0: i32) -> (i32, i32) {
    %c0_i32 = arith.constant 0 : i32
    %c0_i32_0 = arith.constant 0 : i32
    return %c0_i32, %arg0 : i32, i32
  }
}

</mosaic_0001>

<llo_original>
// kernel: tpu_custom_call.1
$region0: #{tpu_custom_call.1}
  #allocation0 [shape = 'u32[]', space=smem, size = 0x4, offset = 0x4, fixed_abs, tag = 'smem constant byte address 0x4 - core index']
  #allocation1 [shape = 'u32[144,128]{1,0:T(1,128)}', space=vmem, size = 0x12000, scoped, tag = 'internal scratch']
  #allocation2 [shape = 'f32[1,1]{1,0:T(1,128)S(1)}', space=vmem, size = 0x200, scoped, tag = 'scoped memory for tpu_custom_call.1']
  %s0 = inlined_call_operand.hbm [shape: f32[8,16], index: 0, kind: input, shape index: {}]
  %s1 = inlined_call_operand.vmem [shape: f32[8,4], index: 1, kind: input, shape index: {}]
  %s2 = inlined_call_operand.vmem [shape: f32[16,128], index: 2, kind: input, shape index: {}]
  %s3 = inlined_call_operand.vmem [shape: f32[4,128], index: 3, kind: input, shape index: {}]
  %s4 = inlined_call_operand.vmem [shape: f32[1,128], index: 4, kind: input, shape index: {}]
  %s5 = inlined_call_operand.hbm [shape: f32[128,128], index: 5, kind: input, shape index: {}]
  %s6 = inlined_call_operand.vmem [shape: f32[1,128], index: 6, kind: input, shape index: {}]
  %s7 = inlined_call_operand.vmem [shape: f32[1,128], index: 7, kind: input, shape index: {}]
  %s8 = inlined_call_operand.<no memory space> [shape: f32[1,1], index: 8, kind: input, shape index: {}]
  %s9 = inlined_call_operand.hbm [shape: f32[1,8], index: 9, kind: output, shape index: {}]
  %s10 = sld [smem:[#allocation0]]
  $region54: #{tpu_custom_call.1} parent=0
    _
  %s12 = ssub.s32 1, %s10
  %s13 = scalar_select 0, %s12, %s10
  %v14 = vstv %s8
  %15 = vst [vmem:[#allocation2] sm:$0x1] %v14
  $region1: #{tpu_custom_call.1} parent=0
    #allocation3 [shape = 'u8[4096]{0}', space=vmem, size = 0x1000, scoped, tag = 'input window, operand 0, single buffered']
    #allocation4 [shape = 's32[1]{0}', space=sflag, size = 0x4, scoped, tag = 'scoped memory for tpu_custom_call.1']
    #allocation5 [shape = 's32[1]{0}', space=sflag, size = 0x4, scoped, tag = 'scoped memory for tpu_custom_call.1']
    #allocation6 [shape = 'u8[65536]{0}', space=vmem, size = 0x10000, scoped, tag = 'input window, operand 5, single buffered']
    #allocation7 [shape = 's32[1]{0}', space=sflag, size = 0x4, scoped, tag = 'scoped memory for tpu_custom_call.1']
    #allocation8 [shape = 'u8[512]{0}', space=vmem, size = 0x400, scoped, tag = 'output window, operand 0, single buffered']
    %16 = vsyncpa [#allocation4], 0
    %17 = vsyncpa [#allocation7], 0
    %18 = vsyncpa [#allocation5], 0
    // Predicated region
    $region2: #{tpu_custom_call.1} parent=1 // pred_check
      _
    $region3: #{tpu_custom_call.1} parent=1 // pred_check_branch
      %20 = sbr.rel (0) target = $region5
    $region4: #{tpu_custom_call.1} parent=1 // pred_region
      %s22 = ssub.s32 128, 128
      %23 = vsyncadd [#allocation4], %s22
      %s25 = sshll.u32 [#allocation3], 4
      %s26 = int_to_ptr.vmem [resolvable:$true] %s25
      %28 = dma.hbm_to_vmem [thread:$0]  %s0, 128, %s26, [#allocation4]
    $region5: #{tpu_custom_call.1} parent=1 // pred_fallthru
      _
    // Predicated region
    $region6: #{tpu_custom_call.1} parent=1 // pred_check
      _
    $region7: #{tpu_custom_call.1} parent=1 // pred_check_branch
      %30 = sbr.rel (0) target = $region9
    $region8: #{tpu_custom_call.1} parent=1 // pred_region
      _
    $region9: #{tpu_custom_call.1} parent=1 // pred_fallthru
      _
    // Predicated region
    $region10: #{tpu_custom_call.1} parent=1 // pred_check
      _
    $region11: #{tpu_custom_call.1} parent=1 // pred_check_branch
      %32 = sbr.rel (0) target = $region13
    $region12: #{tpu_custom_call.1} parent=1 // pred_region
      _
    $region13: #{tpu_custom_call.1} parent=1 // pred_fallthru
      _
    // Predicated region
    $region14: #{tpu_custom_call.1} parent=1 // pred_check
      _
    $region15: #{tpu_custom_call.1} parent=1 // pred_check_branch
      %34 = sbr.rel (0) target = $region17
    $region16: #{tpu_custom_call.1} parent=1 // pred_region
      _
    $region17: #{tpu_custom_call.1} parent=1 // pred_fallthru
      _
    // Predicated region
    $region18: #{tpu_custom_call.1} parent=1 // pred_check
      _
    $region19: #{tpu_custom_call.1} parent=1 // pred_check_branch
      %36 = sbr.rel (0) target = $region21
    $region20: #{tpu_custom_call.1} parent=1 // pred_region
      _
    $region21: #{tpu_custom_call.1} parent=1 // pred_fallthru
      _
    // Predicated region
    $region22: #{tpu_custom_call.1} parent=1 // pred_check
      _
    $region23: #{tpu_custom_call.1} parent=1 // pred_check_branch
      %38 = sbr.rel (0) target = $region25
    $region24: #{tpu_custom_call.1} parent=1 // pred_region
      %s40 = ssub.s32 2048, 2048
      %41 = vsyncadd [#allocation7], %s40
      %s42 = sshll.u32 [#allocation6], 4
      %s43 = int_to_ptr.vmem [resolvable:$true] %s42
      %48 = dma.hbm_to_vmem [thread:$0]  %s5, 2048, %s43, [#allocation7], 128, 128, 8
    $region25: #{tpu_custom_call.1} parent=1 // pred_fallthru
      _
    // Predicated region
    $region26: #{tpu_custom_call.1} parent=1 // pred_check
      _
    $region27: #{tpu_custom_call.1} parent=1 // pred_check_branch
      %50 = sbr.rel (0) target = $region29
    $region28: #{tpu_custom_call.1} parent=1 // pred_region
      _
    $region29: #{tpu_custom_call.1} parent=1 // pred_fallthru
      _
    // Predicated region
    $region30: #{tpu_custom_call.1} parent=1 // pred_check
      _
    $region31: #{tpu_custom_call.1} parent=1 // pred_check_branch
      %52 = sbr.rel (0) target = $region33
    $region32: #{tpu_custom_call.1} parent=1 // pred_region
      _
    $region33: #{tpu_custom_call.1} parent=1 // pred_fallthru
      _
    // Predicated region
    $region34: #{tpu_custom_call.1} parent=1 // pred_check
      _
    $region35: #{tpu_custom_call.1} parent=1 // pred_check_branch
      %54 = sbr.rel (0) target = $region37
    $region36: #{tpu_custom_call.1} parent=1 // pred_region
      _
    $region37: #{tpu_custom_call.1} parent=1 // pred_fallthru
      _
    // Predicated region
    $region38: #{tpu_custom_call.1} parent=1 // pred_check
      _
    $region39: #{tpu_custom_call.1} parent=1 // pred_check_branch
      %56 = sbr.rel (0) target = $region41
    $region40: #{tpu_custom_call.1} parent=1 // pred_region
      %57 = dma.done [#allocation4], 128
    $region41: #{tpu_custom_call.1} parent=1 // pred_fallthru
      _
    // Predicated region
    $region42: #{tpu_custom_call.1} parent=1 // pred_check
      _
    $region43: #{tpu_custom_call.1} parent=1 // pred_check_branch
      %59 = sbr.rel (0) target = $region45
    $region44: #{tpu_custom_call.1} parent=1 // pred_region
      %60 = dma.done [#allocation7], 2048
    $region45: #{tpu_custom_call.1} parent=1 // pred_fallthru
      _
    %v61 = vld [vmem:[#allocation3] sm:$0xff]
    %v62 = vld [vmem:[%s1] sm:$0xff]
    %v63 = vld [vmem:[%s2] sm:$0xff]
    %v64 = vld [vmem:[%s2 + $0x8] sm:$0xff]
    %v65 = vld [vmem:[%s3] sm:$0xf]
    %vm66 = vcmask 31744
    %v68 = vsel %vm66, %v62, 0
    %vm70 = vcmask 1043456
    %v72 = vsel %vm70, %v65, 0
    %74 = vmatprep.subr.mxu0 0.0
    %75 = vmatpush1.msra.mxu0 %v72
    %76 = vmatprep.subr.mxu0 0.0
    %77 = vmatpush1.msra.mxu0 0.0
    %78 = vmatprep.subr.mxu0 0.0
    %79 = vmatpush1.msra.mxu0 0.0
    %80 = vmatprep.subr.mxu0 0.0
    %81 = vmatpush1.msra.mxu0 0.0
    %82 = vmatprep.subr.mxu0 0.0
    %83 = vmatpush1.msra.mxu0 0.0
    %84 = vmatprep.subr.mxu0 0.0
    %85 = vmatpush1.msra.mxu0 0.0
    %86 = vmatprep.subr.mxu0 0.0
    %87 = vmatpush1.msra.mxu0 0.0
    %88 = vmatprep.subr.mxu0 0.0
    %89 = vmatpush1.msra.mxu0 0.0
    %90 = vmatprep.subr.mxu0 0.0
    %91 = vmatpush1.msra.mxu0 0.0
    %92 = vmatprep.subr.mxu0 0.0
    %93 = vmatpush1.msra.mxu0 0.0
    %94 = vmatprep.subr.mxu0 0.0
    %95 = vmatpush1.msra.mxu0 0.0
    %96 = vmatprep.subr.mxu0 0.0
    %97 = vmatpush1.msra.mxu0 0.0
    %98 = vmatprep.subr.mxu0 0.0
    %99 = vmatpush1.msra.mxu0 0.0
    %100 = vmatprep.subr.mxu0 0.0
    %101 = vmatpush1.msra.mxu0 0.0
    %102 = vmatprep.subr.mxu0 0.0
    %103 = vmatpush1.msra.mxu0 0.0
    %104 = vmatprep.subr.mxu0 0.0
    %105 = vmatpush1.msra.mxu0 0.0
    %106 = vmatprep.subr.mxu0 0.0
    %107 = vmatpush1.msra.mxu0 0.0
    %108 = vmatprep.subr.mxu0 0.0
    %109 = vmatpush1.msra.mxu0 0.0
    %110 = vmatprep.subr.mxu0 0.0
    %111 = vmatpush1.msra.mxu0 0.0
    %112 = vmatprep.subr.mxu0 0.0
    %113 = vmatpush1.msra.mxu0 0.0
    %114 = vmatprep.subr.mxu0 0.0
    %115 = vmatpush1.msra.mxu0 0.0
    %116 = vmatprep.subr.mxu0 0.0
    %117 = vmatpush1.msra.mxu0 0.0
    %118 = vmatprep.subr.mxu0 0.0
    %119 = vmatpush1.msra.mxu0 0.0
    %120 = vmatprep.subr.mxu0 0.0
    %121 = vmatpush1.msra.mxu0 0.0
    %122 = vmatprep.subr.mxu0 0.0
    %123 = vmatpush1.msra.mxu0 0.0
    %124 = vmatprep.subr.mxu0 0.0
    %125 = vmatpush1.msra.mxu0 0.0
    %126 = vmatprep.subr.mxu0 0.0
    %127 = vmatpush1.msra.mxu0 0.0
    %128 = vmatprep.subr.mxu0 0.0
    %129 = vmatpush1.msra.mxu0 0.0
    %130 = vmatprep.subr.mxu0 0.0
    %131 = vmatpush1.msra.mxu0 0.0
    %132 = vmatprep.subr.mxu0 0.0
    %133 = vmatpush1.msra.mxu0 0.0
    %134 = vmatprep.subr.mxu0 0.0
    %135 = vmatpush1.msra.mxu0 0.0
    %136 = vmatprep.subr.mxu0 0.0
    %137 = vmatpush1.msra.mxu0 0.0
    %138 = vmatprep.mubr.f32.mxu0 0.0
    %139 = vmatmul.mubr.f32.gmra.mrb[0].mxu0 %v68
    %v140 = vpop.f32.mrb[0].mxu0
    %v141 = vadd.f32 0.0, %v140
    %v142 = vpop.f32.mrb[0].mxu0
    %143 = vdwg.mxu0
    %vm144 = vcmask 130048
    %v146 = vsel %vm144, %v61, 0
    %148 = vmatprep.subr.mxu0 0.0
    %149 = vmatpush1.msra.mxu0 %v63
    %150 = vmatprep.subr.mxu0 0.0
    %151 = vmatpush1.msra.mxu0 %v64
    %152 = vmatprep.subr.mxu0 0.0
    %153 = vmatpush1.msra.mxu0 0.0
    %154 = vmatprep.subr.mxu0 0.0
    %155 = vmatpush1.msra.mxu0 0.0
    %156 = vmatprep.subr.mxu0 0.0
    %157 = vmatpush1.msra.mxu0 0.0
    %158 = vmatprep.subr.mxu0 0.0
    %159 = vmatpush1.msra.mxu0 0.0
    %160 = vmatprep.subr.mxu0 0.0
    %161 = vmatpush1.msra.mxu0 0.0
    %162 = vmatprep.subr.mxu0 0.0
    %163 = vmatpush1.msra.mxu0 0.0
    %164 = vmatprep.subr.mxu0 0.0
    %165 = vmatpush1.msra.mxu0 0.0
    %166 = vmatprep.subr.mxu0 0.0
    %167 = vmatpush1.msra.mxu0 0.0
    %168 = vmatprep.subr.mxu0 0.0
    %169 = vmatpush1.msra.mxu0 0.0
    %170 = vmatprep.subr.mxu0 0.0
    %171 = vmatpush1.msra.mxu0 0.0
    %172 = vmatprep.subr.mxu0 0.0
    %173 = vmatpush1.msra.mxu0 0.0
    %174 = vmatprep.subr.mxu0 0.0
    %175 = vmatpush1.msra.mxu0 0.0
    %176 = vmatprep.subr.mxu0 0.0
    %177 = vmatpush1.msra.mxu0 0.0
    %178 = vmatprep.subr.mxu0 0.0
    %179 = vmatpush1.msra.mxu0 0.0
    %180 = vmatprep.subr.mxu0 0.0
    %181 = vmatpush1.msra.mxu0 0.0
    %182 = vmatprep.subr.mxu0 0.0
    %183 = vmatpush1.msra.mxu0 0.0
    %184 = vmatprep.subr.mxu0 0.0
    %185 = vmatpush1.msra.mxu0 0.0
    %186 = vmatprep.subr.mxu0 0.0
    %187 = vmatpush1.msra.mxu0 0.0
    %188 = vmatprep.subr.mxu0 0.0
    %189 = vmatpush1.msra.mxu0 0.0
    %190 = vmatprep.subr.mxu0 0.0
    %191 = vmatpush1.msra.mxu0 0.0
    %192 = vmatprep.subr.mxu0 0.0
    %193 = vmatpush1.msra.mxu0 0.0
    %194 = vmatprep.subr.mxu0 0.0
    %195 = vmatpush1.msra.mxu0 0.0
    %196 = vmatprep.subr.mxu0 0.0
    %197 = vmatpush1.msra.mxu0 0.0
    %198 = vmatprep.subr.mxu0 0.0
    %199 = vmatpush1.msra.mxu0 0.0
    %200 = vmatprep.subr.mxu0 0.0
    %201 = vmatpush1.msra.mxu0 0.0
    %202 = vmatprep.subr.mxu0 0.0
    %203 = vmatpush1.msra.mxu0 0.0
    %204 = vmatprep.subr.mxu0 0.0
    %205 = vmatpush1.msra.mxu0 0.0
    %206 = vmatprep.subr.mxu0 0.0
    %207 = vmatpush1.msra.mxu0 0.0
    %208 = vmatprep.subr.mxu0 0.0
    %209 = vmatpush1.msra.mxu0 0.0
    %210 = vmatprep.subr.mxu0 0.0
    %211 = vmatpush1.msra.mxu0 0.0
    %212 = vmatprep.mubr.f32.mxu0 0.0
    %213 = vmatmul.mubr.f32.gmra.mrb[0].mxu0 %v146
    %v214 = vpop.f32.mrb[0].mxu0
    %v215 = vadd.f32 %v141, %v214
    %v216 = vpop.f32.mrb[0].mxu0
    %217 = vdwg.mxu0
    %v218 = vld [vmem:[%s4] sm:$0x1]
    %v220 = vlaneseq
    %v221 = vshrl.u32 %v220, 7
    %v222 = vsub.s32 0, %v221
    %v223 = vrot.slane %v218, %v222
    %v225 = vadd.f32 %v215, %v223
    %v226 = vmax.f32 %v225, 0.0
    %v227 = vld [vmem:[#allocation6] sm:$0xff]
    %v228 = vld [vmem:[#allocation6 + $0x8] sm:$0xff]
    %v229 = vld [vmem:[#allocation6 + $0x10] sm:$0xff]
    %v230 = vld [vmem:[#allocation6 + $0x18] sm:$0xff]
    %v231 = vld [vmem:[#allocation6 + $0x20] sm:$0xff]
    %v232 = vld [vmem:[#allocation6 + $0x28] sm:$0xff]
    %v233 = vld [vmem:[#allocation6 + $0x30] sm:$0xff]
    %v234 = vld [vmem:[#allocation6 + $0x38] sm:$0xff]
    %v235 = vld [vmem:[#allocation6 + $0x40] sm:$0xff]
    %v236 = vld [vmem:[#allocation6 + $0x48] sm:$0xff]
    %v237 = vld [vmem:[#allocation6 + $0x50] sm:$0xff]
    %v238 = vld [vmem:[#allocation6 + $0x58] sm:$0xff]
    %v239 = vld [vmem:[#allocation6 + $0x60] sm:$0xff]
    %v240 = vld [vmem:[#allocation6 + $0x68] sm:$0xff]
    %v241 = vld [vmem:[#allocation6 + $0x70] sm:$0xff]
    %v242 = vld [vmem:[#allocation6 + $0x78] sm:$0xff]
    %v243 = vld [vmem:[%s6] sm:$0x1]
    %v245 = vlaneseq
    %v246 = vshrl.u32 %v245, 7
    %v247 = vsub.s32 0, %v246
    %v248 = vrot.slane %v243, %v247
    %250 = vmatprep.subr.mxu0 0.0
    %251 = vmatpush1.msra.mxu0 %v227
    %252 = vmatprep.subr.mxu0 0.0
    %253 = vmatpush1.msra.mxu0 %v228
    %254 = vmatprep.subr.mxu0 0.0
    %255 = vmatpush1.msra.mxu0 %v229
    %256 = vmatprep.subr.mxu0 0.0
    %257 = vmatpush1.msra.mxu0 %v230
    %258 = vmatprep.subr.mxu0 0.0
    %259 = vmatpush1.msra.mxu0 %v231
    %260 = vmatprep.subr.mxu0 0.0
    %261 = vmatpush1.msra.mxu0 %v232
    %262 = vmatprep.subr.mxu0 0.0
    %263 = vmatpush1.msra.mxu0 %v233
    %264 = vmatprep.subr.mxu0 0.0
    %265 = vmatpush1.msra.mxu0 %v234
    %266 = vmatprep.subr.mxu0 0.0
    %267 = vmatpush1.msra.mxu0 %v235
    %268 = vmatprep.subr.mxu0 0.0
    %269 = vmatpush1.msra.mxu0 %v236
    %270 = vmatprep.subr.mxu0 0.0
    %271 = vmatpush1.msra.mxu0 %v237
    %272 = vmatprep.subr.mxu0 0.0
    %273 = vmatpush1.msra.mxu0 %v238
    %274 = vmatprep.subr.mxu0 0.0
    %275 = vmatpush1.msra.mxu0 %v239
    %276 = vmatprep.subr.mxu0 0.0
    %277 = vmatpush1.msra.mxu0 %v240
    %278 = vmatprep.subr.mxu0 0.0
    %279 = vmatpush1.msra.mxu0 %v241
    %280 = vmatprep.subr.mxu0 0.0
    %281 = vmatpush1.msra.mxu0 %v242
    %282 = vmatprep.subr.mxu0 0.0
    %283 = vmatpush1.msra.mxu0 0.0
    %284 = vmatprep.subr.mxu0 0.0
    %285 = vmatpush1.msra.mxu0 0.0
    %286 = vmatprep.subr.mxu0 0.0
    %287 = vmatpush1.msra.mxu0 0.0
    %288 = vmatprep.subr.mxu0 0.0
    %289 = vmatpush1.msra.mxu0 0.0
    %290 = vmatprep.subr.mxu0 0.0
    %291 = vmatpush1.msra.mxu0 0.0
    %292 = vmatprep.subr.mxu0 0.0
    %293 = vmatpush1.msra.mxu0 0.0
    %294 = vmatprep.subr.mxu0 0.0
    %295 = vmatpush1.msra.mxu0 0.0
    %296 = vmatprep.subr.mxu0 0.0
    %297 = vmatpush1.msra.mxu0 0.0
    %298 = vmatprep.subr.mxu0 0.0
    %299 = vmatpush1.msra.mxu0 0.0
    %300 = vmatprep.subr.mxu0 0.0
    %301 = vmatpush1.msra.mxu0 0.0
    %302 = vmatprep.subr.mxu0 0.0
    %303 = vmatpush1.msra.mxu0 0.0
    %304 = vmatprep.subr.mxu0 0.0
    %305 = vmatpush1.msra.mxu0 0.0
    %306 = vmatprep.subr.mxu0 0.0
    %307 = vmatpush1.msra.mxu0 0.0
    %308 = vmatprep.subr.mxu0 0.0
    %309 = vmatpush1.msra.mxu0 0.0
    %310 = vmatprep.subr.mxu0 0.0
    %311 = vmatpush1.msra.mxu0 0.0
    %312 = vmatprep.subr.mxu0 0.0
    %313 = vmatpush1.msra.mxu0 0.0
    %314 = vmatprep.mubr.f32.mxu0 0.0
    %315 = vmatmul.mubr.f32.gmra.mrb[0].mxu0 %v226
    %v316 = vpop.f32.mrb[0].mxu0
    %v317 = vadd.f32 %v248, %v316
    %v318 = vpop.f32.mrb[0].mxu0
    %319 = vdwg.mxu0
    %v320 = vmax.f32 %v317, 0.0
    %v321 = vld [vmem:[%s7] sm:$0x1]
    %v322 = vld [vmem:[#allocation2] sm:$0x1]
    %324 = vset.pattern.permute.xlu0 0
    %325 = vperm.xlu0 %324, %v322
    %v326 = vpop.permute.xlu0 %325
    %v328 = vlaneseq
    %v329 = vshrl.u32 %v328, 7
    %v330 = vsub.s32 0, %v329
    %v331 = vrot.slane %v326, %v330
    %332 = vmatprep.subr.mxu0 0.0
    %333 = vmatpush1.xpose.msra.mxu0 %v320
    %334 = vmatprep.subr.mxu0 0.0
    %335 = vmatpush1.xpose.msra.mxu0 0.0
    %336 = vmatprep.subr.mxu0 0.0
    %337 = vmatpush1.xpose.msra.mxu0 0.0
    %338 = vmatprep.subr.mxu0 0.0
    %339 = vmatpush1.xpose.msra.mxu0 0.0
    %340 = vmatprep.subr.mxu0 0.0
    %341 = vmatpush1.xpose.msra.mxu0 0.0
    %342 = vmatprep.subr.mxu0 0.0
    %343 = vmatpush1.xpose.msra.mxu0 0.0
    %344 = vmatprep.subr.mxu0 0.0
    %345 = vmatpush1.xpose.msra.mxu0 0.0
    %346 = vmatprep.subr.mxu0 0.0
    %347 = vmatpush1.xpose.msra.mxu0 0.0
    %348 = vmatprep.subr.mxu0 0.0
    %349 = vmatpush1.xpose.msra.mxu0 0.0
    %350 = vmatprep.subr.mxu0 0.0
    %351 = vmatpush1.xpose.msra.mxu0 0.0
    %352 = vmatprep.subr.mxu0 0.0
    %353 = vmatpush1.xpose.msra.mxu0 0.0
    %354 = vmatprep.subr.mxu0 0.0
    %355 = vmatpush1.xpose.msra.mxu0 0.0
    %356 = vmatprep.subr.mxu0 0.0
    %357 = vmatpush1.xpose.msra.mxu0 0.0
    %358 = vmatprep.subr.mxu0 0.0
    %359 = vmatpush1.xpose.msra.mxu0 0.0
    %360 = vmatprep.subr.mxu0 0.0
    %361 = vmatpush1.xpose.msra.mxu0 0.0
    %362 = vmatprep.subr.mxu0 0.0
    %363 = vmatpush1.xpose.msra.mxu0 0.0
    %364 = vmatprep.subr.mxu0 0.0
    %365 = vmatpush1.xpose.msra.mxu0 0.0
    %366 = vmatprep.subr.mxu0 0.0
    %367 = vmatpush1.xpose.msra.mxu0 0.0
    %368 = vmatprep.subr.mxu0 0.0
    %369 = vmatpush1.xpose.msra.mxu0 0.0
    %370 = vmatprep.subr.mxu0 0.0
    %371 = vmatpush1.xpose.msra.mxu0 0.0
    %372 = vmatprep.subr.mxu0 0.0
    %373 = vmatpush1.xpose.msra.mxu0 0.0
    %374 = vmatprep.subr.mxu0 0.0
    %375 = vmatpush1.xpose.msra.mxu0 0.0
    %376 = vmatprep.subr.mxu0 0.0
    %377 = vmatpush1.xpose.msra.mxu0 0.0
    %378 = vmatprep.subr.mxu0 0.0
    %379 = vmatpush1.xpose.msra.mxu0 0.0
    %380 = vmatprep.subr.mxu0 0.0
    %381 = vmatpush1.xpose.msra.mxu0 0.0
    %382 = vmatprep.subr.mxu0 0.0
    %383 = vmatpush1.xpose.msra.mxu0 0.0
    %384 = vmatprep.subr.mxu0 0.0
    %385 = vmatpush1.xpose.msra.mxu0 0.0
    %386 = vmatprep.subr.mxu0 0.0
    %387 = vmatpush1.xpose.msra.mxu0 0.0
    %388 = vmatprep.subr.mxu0 0.0
    %389 = vmatpush1.xpose.msra.mxu0 0.0
    %390 = vmatprep.subr.mxu0 0.0
    %391 = vmatpush1.xpose.msra.mxu0 0.0
    %392 = vmatprep.subr.mxu0 0.0
    %393 = vmatpush1.xpose.msra.mxu0 0.0
    %394 = vmatprep.subr.mxu0 0.0
    %395 = vmatpush1.xpose.msra.mxu0 0.0
    %396 = vmatprep.mubr.f32.mxu0 0.0
    %397 = vmatmul.mubr.f32.gmra.mrb[0].mxu0 %v321
    %v398 = vpop.f32.mrb[0].mxu0
    %v399 = vadd.f32 %v331, %v398
    %v400 = vpop.f32.mrb[0].mxu0
    %401 = vdwg.mxu0
    %vm402 = vcmask 57344
    %403 = vst.msk [vmem:[#allocation8] sm:$0x1] %vm402, %v399
    // Predicated region
    $region46: #{tpu_custom_call.1} parent=1 // pred_check
      _
    $region47: #{tpu_custom_call.1} parent=1 // pred_check_branch
      %405 = sbr.rel (0) target = $region49
    $region48: #{tpu_custom_call.1} parent=1 // pred_region
      %s407 = ssub.s32 16, 16
      %408 = vsyncadd [#allocation5], %s407
      %s410 = sshll.u32 [#allocation8], 4
      %s411 = int_to_ptr.vmem [resolvable:$true] %s410
      %413 = dma.vmem_to_hbm [thread:$0]  %s411, 16, %s9, [#allocation5]
    $region49: #{tpu_custom_call.1} parent=1 // pred_fallthru
      _
    // Predicated region
    $region50: #{tpu_custom_call.1} parent=1 // pred_check
      _
    $region51: #{tpu_custom_call.1} parent=1 // pred_check_branch
      %415 = sbr.rel (0) target = $region53
    $region52: #{tpu_custom_call.1} parent=1 // pred_region
      %416 = dma.done [#allocation5], 16
    $region53: #{tpu_custom_call.1} parent=1 // pred_fallthru
      _
    %417 = vsyncpa [#allocation4], 1
    %418 = vsyncpa [#allocation7], 1
    %419 = vsyncpa [#allocation5], 1

// kernel: tpu_custom_call.1
$region0: #{tpu_custom_call.1}
  #allocation0 [shape = 'u32[]', space=smem, size = 0x4, offset = 0x4, fixed_abs, tag = 'smem constant byte address 0x4 - core index']
  #allocation1 [shape = 'u32[144,128]{1,0:T(1,128)}', space=vmem, size = 0x12000, scoped, tag = 'internal scratch']
  #allocation2 [shape = 'f32[1,1]{1,0:T(1,128)S(1)}', space=vmem, size = 0x200, scoped, tag = 'scoped memory for tpu_custom_call.1']
  %s0 = inlined_call_operand.hbm [shape: f32[8,16], index: 0, kind: input, shape index: {}]
  %s1 = inlined_call_operand.vmem [shape: f32[8,4], index: 1, kind: input, shape index: {}]
  %s2 = inlined_call_operand.vmem [shape: f32[16,128], index: 2, kind: input, shape index: {}]
  %s3 = inlined_call_operand.vmem [shape: f32[4,128], index: 3, kind: input, shape index: {}]
  %s4 = inlined_call_operand.vmem [shape: f32[1,128], index: 4, kind: input, shape index: {}]
  %s5 = inlined_call_operand.hbm [shape: f32[128,128], index: 5, kind: input, shape index: {}]
  %s6 = inlined_call_operand.vmem [shape: f32[1,128], index: 6, kind: input, shape index: {}]
  %s7 = inlined_call_operand.vmem [shape: f32[1,128], index: 7, kind: input, shape index: {}]
  %s8 = inlined_call_operand.<no memory space> [shape: f32[1,1], index: 8, kind: input, shape index: {}]
  %s9 = inlined_call_operand.hbm [shape: f32[1,8], index: 9, kind: output, shape index: {}]
  %s10 = sld [smem:[#allocation0]]
  $region54: #{tpu_custom_call.1} parent=0
    _
  %s12 = ssub.s32 1, %s10
  %s13 = scalar_select 0, %s12, %s10
  %v14 = vstv %s8
  %15 = vst [vmem:[#allocation2] sm:$0x1] %v14
  $region1: #{tpu_custom_call.1} parent=0
    #allocation3 [shape = 'u8[4096]{0}', space=vmem, size = 0x1000, scoped, tag = 'input window, operand 0, single buffered']
    #allocation4 [shape = 's32[1]{0}', space=sflag, size = 0x4, scoped, tag = 'scoped memory for tpu_custom_call.1']
    #allocation5 [shape = 's32[1]{0}', space=sflag, size = 0x4, scoped, tag = 'scoped memory for tpu_custom_call.1']
    #allocation6 [shape = 'u8[65536]{0}', space=vmem, size = 0x10000, scoped, tag = 'input window, operand 5, single buffered']
    #allocation7 [shape = 's32[1]{0}', space=sflag, size = 0x4, scoped, tag = 'scoped memory for tpu_custom_call.1']
    #allocation8 [shape = 'u8[512]{0}', space=vmem, size = 0x400, scoped, tag = 'output window, operand 0, single buffered']
    %16 = vsyncpa [#allocation4], 0
    %17 = vsyncpa [#allocation7], 0
    %18 = vsyncpa [#allocation5], 0
    // Predicated region
    $region2: #{tpu_custom_call.1} parent=1 // pred_check
      _
    $region3: #{tpu_custom_call.1} parent=1 // pred_check_branch
      %20 = sbr.rel (0) target = $region5
    $region4: #{tpu_custom_call.1} parent=1 // pred_region
      %s22 = ssub.s32 128, 128
      %23 = vsyncadd [#allocation4], %s22
      %s25 = sshll.u32 [#allocation3], 4
      %s26 = int_to_ptr.vmem [resolvable:$true] %s25
      %28 = dma.hbm_to_vmem [thread:$0]  %s0, 128, %s26, [#allocation4]
    $region5: #{tpu_custom_call.1} parent=1 // pred_fallthru
      _
    // Predicated region
    $region6: #{tpu_custom_call.1} parent=1 // pred_check
      _
    $region7: #{tpu_custom_call.1} parent=1 // pred_check_branch
      %30 = sbr.rel (0) target = $region9
    $region8: #{tpu_custom_call.1} parent=1 // pred_region
      _
    $region9: #{tpu_custom_call.1} parent=1 // pred_fallthru
      _
    // Predicated region
    $region10: #{tpu_custom_call.1} parent=1 // pred_check
      _
    $region11: #{tpu_custom_call.1} parent=1 // pred_check_branch
      %32 = sbr.rel (0) target = $region13
    $region12: #{tpu_custom_call.1} parent=1 // pred_region
      _
    $region13: #{tpu_custom_call.1} parent=1 // pred_fallthru
      _
    // Predicated region
    $region14: #{tpu_custom_call.1} parent=1 // pred_check
      _
    $region15: #{tpu_custom_call.1} parent=1 // pred_check_branch
      %34 = sbr.rel (0) target = $region17
    $region16: #{tpu_custom_call.1} parent=1 // pred_region
      _
    $region17: #{tpu_custom_call.1} parent=1 // pred_fallthru
      _
    // Predicated region
    $region18: #{tpu_custom_call.1} parent=1 // pred_check
      _
    $region19: #{tpu_custom_call.1} parent=1 // pred_check_branch
      %36 = sbr.rel (0) target = $region21
    $region20: #{tpu_custom_call.1} parent=1 // pred_region
      _
    $region21: #{tpu_custom_call.1} parent=1 // pred_fallthru
      _
    // Predicated region
    $region22: #{tpu_custom_call.1} parent=1 // pred_check
      _
    $region23: #{tpu_custom_call.1} parent=1 // pred_check_branch
      %38 = sbr.rel (0) target = $region25
    $region24: #{tpu_custom_call.1} parent=1 // pred_region
      %s40 = ssub.s32 2048, 2048
      %41 = vsyncadd [#allocation7], %s40
      %s42 = sshll.u32 [#allocation6], 4
      %s43 = int_to_ptr.vmem [resolvable:$true] %s42
      %48 = dma.hbm_to_vmem [thread:$0]  %s5, 2048, %s43, [#allocation7], 128, 128, 8
    $region25: #{tpu_custom_call.1} parent=1 // pred_fallthru
      _
    // Predicated region
    $region26: #{tpu_custom_call.1} parent=1 // pred_check
      _
    $region27: #{tpu_custom_call.1} parent=1 // pred_check_branch
      %50 = sbr.rel (0) target = $region29
    $region28: #{tpu_custom_call.1} parent=1 // pred_region
      _
    $region29: #{tpu_custom_call.1} parent=1 // pred_fallthru
      _
    // Predicated region
    $region30: #{tpu_custom_call.1} parent=1 // pred_check
      _
    $region31: #{tpu_custom_call.1} parent=1 // pred_check_branch
      %52 = sbr.rel (0) target = $region33
    $region32: #{tpu_custom_call.1} parent=1 // pred_region
      _
    $region33: #{tpu_custom_call.1} parent=1 // pred_fallthru
      _
    // Predicated region
    $region34: #{tpu_custom_call.1} parent=1 // pred_check
      _
    $region35: #{tpu_custom_call.1} parent=1 // pred_check_branch
      %54 = sbr.rel (0) target = $region37
    $region36: #{tpu_custom_call.1} parent=1 // pred_region
      _
    $region37: #{tpu_custom_call.1} parent=1 // pred_fallthru
      _
    // Predicated region
    $region38: #{tpu_custom_call.1} parent=1 // pred_check
      _
    $region39: #{tpu_custom_call.1} parent=1 // pred_check_branch
      %56 = sbr.rel (0) target = $region41
    $region40: #{tpu_custom_call.1} parent=1 // pred_region
      %57 = dma.done [#allocation4], 128
    $region41: #{tpu_custom_call.1} parent=1 // pred_fallthru
      _
    // Predicated region
    $region42: #{tpu_custom_call.1} parent=1 // pred_check
      _
    $region43: #{tpu_custom_call.1} parent=1 // pred_check_branch
      %59 = sbr.rel (0) target = $region45
    $region44: #{tpu_custom_call.1} parent=1 // pred_region
      %60 = dma.done [#allocation7], 2048
    $region45: #{tpu_custom_call.1} parent=1 // pred_fallthru
      _
    %v61 = vld [vmem:[#allocation3] sm:$0xff]
    %v62 = vld [vmem:[%s1] sm:$0xff]
    %v63 = vld [vmem:[%s2] sm:$0xff]
    %v64 = vld [vmem:[%s2 + $0x8] sm:$0xff]
    %v65 = vld [vmem:[%s3] sm:$0xf]
    %vm66 = vcmask 31744
    %v68 = vsel %vm66, %v62, 0
    %vm70 = vcmask 1043456
    %v72 = vsel %vm70, %v65, 0
    %74 = vmatprep.subr.mxu0 0.0
    %75 = vmatpush1.msra.mxu0 %v72
    %76 = vmatprep.subr.mxu0 0.0
    %77 = vmatpush1.msra.mxu0 0.0
    %78 = vmatprep.subr.mxu0 0.0
    %79 = vmatpush1.msra.mxu0 0.0
    %80 = vmatprep.subr.mxu0 0.0
    %81 = vmatpush1.msra.mxu0 0.0
    %82 = vmatprep.subr.mxu0 0.0
    %83 = vmatpush1.msra.mxu0 0.0
    %84 = vmatprep.subr.mxu0 0.0
    %85 = vmatpush1.msra.mxu0 0.0
    %86 = vmatprep.subr.mxu0 0.0
    %87 = vmatpush1.msra.mxu0 0.0
    %88 = vmatprep.subr.mxu0 0.0
    %89 = vmatpush1.msra.mxu0 0.0
    %90 = vmatprep.subr.mxu0 0.0
    %91 = vmatpush1.msra.mxu0 0.0
    %92 = vmatprep.subr.mxu0 0.0
    %93 = vmatpush1.msra.mxu0 0.0
    %94 = vmatprep.subr.mxu0 0.0
    %95 = vmatpush1.msra.mxu0 0.0
    %96 = vmatprep.subr.mxu0 0.0
    %97 = vmatpush1.msra.mxu0 0.0
    %98 = vmatprep.subr.mxu0 0.0
    %99 = vmatpush1.msra.mxu0 0.0
    %100 = vmatprep.subr.mxu0 0.0
    %101 = vmatpush1.msra.mxu0 0.0
    %102 = vmatprep.subr.mxu0 0.0
    %103 = vmatpush1.msra.mxu0 0.0
    %104 = vmatprep.subr.mxu0 0.0
    %105 = vmatpush1.msra.mxu0 0.0
    %106 = vmatprep.subr.mxu0 0.0
    %107 = vmatpush1.msra.mxu0 0.0
    %108 = vmatprep.subr.mxu0 0.0
    %109 = vmatpush1.msra.mxu0 0.0
    %110 = vmatprep.subr.mxu0 0.0
    %111 = vmatpush1.msra.mxu0 0.0
    %112 = vmatprep.subr.mxu0 0.0
    %113 = vmatpush1.msra.mxu0 0.0
    %114 = vmatprep.subr.mxu0 0.0
    %115 = vmatpush1.msra.mxu0 0.0
    %116 = vmatprep.subr.mxu0 0.0
    %117 = vmatpush1.msra.mxu0 0.0
    %118 = vmatprep.subr.mxu0 0.0
    %119 = vmatpush1.msra.mxu0 0.0
    %120 = vmatprep.subr.mxu0 0.0
    %121 = vmatpush1.msra.mxu0 0.0
    %122 = vmatprep.subr.mxu0 0.0
    %123 = vmatpush1.msra.mxu0 0.0
    %124 = vmatprep.subr.mxu0 0.0
    %125 = vmatpush1.msra.mxu0 0.0
    %126 = vmatprep.subr.mxu0 0.0
    %127 = vmatpush1.msra.mxu0 0.0
    %128 = vmatprep.subr.mxu0 0.0
    %129 = vmatpush1.msra.mxu0 0.0
    %130 = vmatprep.subr.mxu0 0.0
    %131 = vmatpush1.msra.mxu0 0.0
    %132 = vmatprep.subr.mxu0 0.0
    %133 = vmatpush1.msra.mxu0 0.0
    %134 = vmatprep.subr.mxu0 0.0
    %135 = vmatpush1.msra.mxu0 0.0
    %136 = vmatprep.subr.mxu0 0.0
    %137 = vmatpush1.msra.mxu0 0.0
    %138 = vmatprep.mubr.f32.mxu0 0.0
    %139 = vmatmul.mubr.f32.gmra.mrb[0].mxu0 %v68
    %v140 = vpop.f32.mrb[0].mxu0
    %v141 = vadd.f32 0.0, %v140
    %v142 = vpop.f32.mrb[0].mxu0
    %143 = vdwg.mxu0
    %vm144 = vcmask 130048
    %v146 = vsel %vm144, %v61, 0
    %148 = vmatprep.subr.mxu0 0.0
    %149 = vmatpush1.msra.mxu0 %v63
    %150 = vmatprep.subr.mxu0 0.0
    %151 = vmatpush1.msra.mxu0 %v64
    %152 = vmatprep.subr.mxu0 0.0
    %153 = vmatpush1.msra.mxu0 0.0
    %154 = vmatprep.subr.mxu0 0.0
    %155 = vmatpush1.msra.mxu0 0.0
    %156 = vmatprep.subr.mxu0 0.0
    %157 = vmatpush1.msra.mxu0 0.0
    %158 = vmatprep.subr.mxu0 0.0
    %159 = vmatpush1.msra.mxu0 0.0
    %160 = vmatprep.subr.mxu0 0.0
    %161 = vmatpush1.msra.mxu0 0.0
    %162 = vmatprep.subr.mxu0 0.0
    %163 = vmatpush1.msra.mxu0 0.0
    %164 = vmatprep.subr.mxu0 0.0
    %165 = vmatpush1.msra.mxu0 0.0
    %166 = vmatprep.subr.mxu0 0.0
    %167 = vmatpush1.msra.mxu0 0.0
    %168 = vmatprep.subr.mxu0 0.0
    %169 = vmatpush1.msra.mxu0 0.0
    %170 = vmatprep.subr.mxu0 0.0
    %171 = vmatpush1.msra.mxu0 0.0
    %172 = vmatprep.subr.mxu0 0.0
    %173 = vmatpush1.msra.mxu0 0.0
    %174 = vmatprep.subr.mxu0 0.0
    %175 = vmatpush1.msra.mxu0 0.0
    %176 = vmatprep.subr.mxu0 0.0
    %177 = vmatpush1.msra.mxu0 0.0
    %178 = vmatprep.subr.mxu0 0.0
    %179 = vmatpush1.msra.mxu0 0.0
    %180 = vmatprep.subr.mxu0 0.0
    %181 = vmatpush1.msra.mxu0 0.0
    %182 = vmatprep.subr.mxu0 0.0
    %183 = vmatpush1.msra.mxu0 0.0
    %184 = vmatprep.subr.mxu0 0.0
    %185 = vmatpush1.msra.mxu0 0.0
    %186 = vmatprep.subr.mxu0 0.0
    %187 = vmatpush1.msra.mxu0 0.0
    %188 = vmatprep.subr.mxu0 0.0
    %189 = vmatpush1.msra.mxu0 0.0
    %190 = vmatprep.subr.mxu0 0.0
    %191 = vmatpush1.msra.mxu0 0.0
    %192 = vmatprep.subr.mxu0 0.0
    %193 = vmatpush1.msra.mxu0 0.0
    %194 = vmatprep.subr.mxu0 0.0
    %195 = vmatpush1.msra.mxu0 0.0
    %196 = vmatprep.subr.mxu0 0.0
    %197 = vmatpush1.msra.mxu0 0.0
    %198 = vmatprep.subr.mxu0 0.0
    %199 = vmatpush1.msra.mxu0 0.0
    %200 = vmatprep.subr.mxu0 0.0
    %201 = vmatpush1.msra.mxu0 0.0
    %202 = vmatprep.subr.mxu0 0.0
    %203 = vmatpush1.msra.mxu0 0.0
    %204 = vmatprep.subr.mxu0 0.0
    %205 = vmatpush1.msra.mxu0 0.0
    %206 = vmatprep.subr.mxu0 0.0
    %207 = vmatpush1.msra.mxu0 0.0
    %208 = vmatprep.subr.mxu0 0.0
    %209 = vmatpush1.msra.mxu0 0.0
    %210 = vmatprep.subr.mxu0 0.0
    %211 = vmatpush1.msra.mxu0 0.0
    %212 = vmatprep.mubr.f32.mxu0 0.0
    %213 = vmatmul.mubr.f32.gmra.mrb[0].mxu0 %v146
    %v214 = vpop.f32.mrb[0].mxu0
    %v215 = vadd.f32 %v141, %v214
    %v216 = vpop.f32.mrb[0].mxu0
    %217 = vdwg.mxu0
    %v218 = vld [vmem:[%s4] sm:$0x1]
    %v220 = vlaneseq
    %v221 = vshrl.u32 %v220, 7
    %v222 = vsub.s32 0, %v221
    %v223 = vrot.slane %v218, %v222
    %v225 = vadd.f32 %v215, %v223
    %v226 = vmax.f32 %v225, 0.0
    %v227 = vld [vmem:[#allocation6] sm:$0xff]
    %v228 = vld [vmem:[#allocation6 + $0x8] sm:$0xff]
    %v229 = vld [vmem:[#allocation6 + $0x10] sm:$0xff]
    %v230 = vld [vmem:[#allocation6 + $0x18] sm:$0xff]
    %v231 = vld [vmem:[#allocation6 + $0x20] sm:$0xff]
    %v232 = vld [vmem:[#allocation6 + $0x28] sm:$0xff]
    %v233 = vld [vmem:[#allocation6 + $0x30] sm:$0xff]
    %v234 = vld [vmem:[#allocation6 + $0x38] sm:$0xff]
    %v235 = vld [vmem:[#allocation6 + $0x40] sm:$0xff]
    %v236 = vld [vmem:[#allocation6 + $0x48] sm:$0xff]
    %v237 = vld [vmem:[#allocation6 + $0x50] sm:$0xff]
    %v238 = vld [vmem:[#allocation6 + $0x58] sm:$0xff]
    %v239 = vld [vmem:[#allocation6 + $0x60] sm:$0xff]
    %v240 = vld [vmem:[#allocation6 + $0x68] sm:$0xff]
    %v241 = vld [vmem:[#allocation6 + $0x70] sm:$0xff]
    %v242 = vld [vmem:[#allocation6 + $0x78] sm:$0xff]
    %v243 = vld [vmem:[%s6] sm:$0x1]
    %v245 = vlaneseq
    %v246 = vshrl.u32 %v245, 7
    %v247 = vsub.s32 0, %v246
    %v248 = vrot.slane %v243, %v247
    %250 = vmatprep.subr.mxu0 0.0
    %251 = vmatpush1.msra.mxu0 %v227
    %252 = vmatprep.subr.mxu0 0.0
    %253 = vmatpush1.msra.mxu0 %v228
    %254 = vmatprep.subr.mxu0 0.0
    %255 = vmatpush1.msra.mxu0 %v229
    %256 = vmatprep.subr.mxu0 0.0
    %257 = vmatpush1.msra.mxu0 %v230
    %258 = vmatprep.subr.mxu0 0.0
    %259 = vmatpush1.msra.mxu0 %v231
    %260 = vmatprep.subr.mxu0 0.0
    %261 = vmatpush1.msra.mxu0 %v232
    %262 = vmatprep.subr.mxu0 0.0
    %263 = vmatpush1.msra.mxu0 %v233
    %264 = vmatprep.subr.mxu0 0.0
    %265 = vmatpush1.msra.mxu0 %v234
    %266 = vmatprep.subr.mxu0 0.0
    %267 = vmatpush1.msra.mxu0 %v235
    %268 = vmatprep.subr.mxu0 0.0
    %269 = vmatpush1.msra.mxu0 %v236
    %270 = vmatprep.subr.mxu0 0.0
    %271 = vmatpush1.msra.mxu0 %v237
    %272 = vmatprep.subr.mxu0 0.0
    %273 = vmatpush1.msra.mxu0 %v238
    %274 = vmatprep.subr.mxu0 0.0
    %275 = vmatpush1.msra.mxu0 %v239
    %276 = vmatprep.subr.mxu0 0.0
    %277 = vmatpush1.msra.mxu0 %v240
    %278 = vmatprep.subr.mxu0 0.0
    %279 = vmatpush1.msra.mxu0 %v241
    %280 = vmatprep.subr.mxu0 0.0
    %281 = vmatpush1.msra.mxu0 %v242
    %282 = vmatprep.subr.mxu0 0.0
    %283 = vmatpush1.msra.mxu0 0.0
    %284 = vmatprep.subr.mxu0 0.0
    %285 = vmatpush1.msra.mxu0 0.0
    %286 = vmatprep.subr.mxu0 0.0
    %287 = vmatpush1.msra.mxu0 0.0
    %288 = vmatprep.subr.mxu0 0.0
    %289 = vmatpush1.msra.mxu0 0.0
    %290 = vmatprep.subr.mxu0 0.0
    %291 = vmatpush1.msra.mxu0 0.0
    %292 = vmatprep.subr.mxu0 0.0
    %293 = vmatpush1.msra.mxu0 0.0
    %294 = vmatprep.subr.mxu0 0.0
    %295 = vmatpush1.msra.mxu0 0.0
    %296 = vmatprep.subr.mxu0 0.0
    %297 = vmatpush1.msra.mxu0 0.0
    %298 = vmatprep.subr.mxu0 0.0
    %299 = vmatpush1.msra.mxu0 0.0
    %300 = vmatprep.subr.mxu0 0.0
    %301 = vmatpush1.msra.mxu0 0.0
    %302 = vmatprep.subr.mxu0 0.0
    %303 = vmatpush1.msra.mxu0 0.0
    %304 = vmatprep.subr.mxu0 0.0
    %305 = vmatpush1.msra.mxu0 0.0
    %306 = vmatprep.subr.mxu0 0.0
    %307 = vmatpush1.msra.mxu0 0.0
    %308 = vmatprep.subr.mxu0 0.0
    %309 = vmatpush1.msra.mxu0 0.0
    %310 = vmatprep.subr.mxu0 0.0
    %311 = vmatpush1.msra.mxu0 0.0
    %312 = vmatprep.subr.mxu0 0.0
    %313 = vmatpush1.msra.mxu0 0.0
    %314 = vmatprep.mubr.f32.mxu0 0.0
    %315 = vmatmul.mubr.f32.gmra.mrb[0].mxu0 %v226
    %v316 = vpop.f32.mrb[0].mxu0
    %v317 = vadd.f32 %v248, %v316
    %v318 = vpop.f32.mrb[0].mxu0
    %319 = vdwg.mxu0
    %v320 = vmax.f32 %v317, 0.0
    %v321 = vld [vmem:[%s7] sm:$0x1]
    %v322 = vld [vmem:[#allocation2] sm:$0x1]
    %324 = vset.pattern.permute.xlu0 0
    %325 = vperm.xlu0 %324, %v322
    %v326 = vpop.permute.xlu0 %325
    %v328 = vlaneseq
    %v329 = vshrl.u32 %v328, 7
    %v330 = vsub.s32 0, %v329
    %v331 = vrot.slane %v326, %v330
    %332 = vmatprep.subr.mxu0 0.0
    %333 = vmatpush1.xpose.msra.mxu0 %v320
    %334 = vmatprep.subr.mxu0 0.0
    %335 = vmatpush1.xpose.msra.mxu0 0.0
    %336 = vmatprep.subr.mxu0 0.0
    %337 = vmatpush1.xpose.msra.mxu0 0.0
    %338 = vmatprep.subr.mxu0 0.0
    %339 = vmatpush1.xpose.msra.mxu0 0.0
    %340 = vmatprep.subr.mxu0 0.0
    %341 = vmatpush1.xpose.msra.mxu0 0.0
    %342 = vmatprep.subr.mxu0 0.0
    %343 = vmatpush1.xpose.msra.mxu0 0.0
    %344 = vmatprep.subr.mxu0 0.0
    %345 = vmatpush1.xpose.msra.mxu0 0.0
    %346 = vmatprep.subr.mxu0 0.0
    %347 = vmatpush1.xpose.msra.mxu0 0.0
    %348 = vmatprep.subr.mxu0 0.0
    %349 = vmatpush1.xpose.msra.mxu0 0.0
    %350 = vmatprep.subr.mxu0 0.0
    %351 = vmatpush1.xpose.msra.mxu0 0.0
    %352 = vmatprep.subr.mxu0 0.0
    %353 = vmatpush1.xpose.msra.mxu0 0.0
    %354 = vmatprep.subr.mxu0 0.0
    %355 = vmatpush1.xpose.msra.mxu0 0.0
    %356 = vmatprep.subr.mxu0 0.0
    %357 = vmatpush1.xpose.msra.mxu0 0.0
    %358 = vmatprep.subr.mxu0 0.0
    %359 = vmatpush1.xpose.msra.mxu0 0.0
    %360 = vmatprep.subr.mxu0 0.0
    %361 = vmatpush1.xpose.msra.mxu0 0.0
    %362 = vmatprep.subr.mxu0 0.0
    %363 = vmatpush1.xpose.msra.mxu0 0.0
    %364 = vmatprep.subr.mxu0 0.0
    %365 = vmatpush1.xpose.msra.mxu0 0.0
    %366 = vmatprep.subr.mxu0 0.0
    %367 = vmatpush1.xpose.msra.mxu0 0.0
    %368 = vmatprep.subr.mxu0 0.0
    %369 = vmatpush1.xpose.msra.mxu0 0.0
    %370 = vmatprep.subr.mxu0 0.0
    %371 = vmatpush1.xpose.msra.mxu0 0.0
    %372 = vmatprep.subr.mxu0 0.0
    %373 = vmatpush1.xpose.msra.mxu0 0.0
    %374 = vmatprep.subr.mxu0 0.0
    %375 = vmatpush1.xpose.msra.mxu0 0.0
    %376 = vmatprep.subr.mxu0 0.0
    %377 = vmatpush1.xpose.msra.mxu0 0.0
    %378 = vmatprep.subr.mxu0 0.0
    %379 = vmatpush1.xpose.msra.mxu0 0.0
    %380 = vmatprep.subr.mxu0 0.0
    %381 = vmatpush1.xpose.msra.mxu0 0.0
    %382 = vmatprep.subr.mxu0 0.0
    %383 = vmatpush1.xpose.msra.mxu0 0.0
    %384 = vmatprep.subr.mxu0 0.0
    %385 = vmatpush1.xpose.msra.mxu0 0.0
    %386 = vmatprep.subr.mxu0 0.0
    %387 = vmatpush1.xpose.msra.mxu0 0.0
    %388 = vmatprep.subr.mxu0 0.0
    %389 = vmatpush1.xpose.msra.mxu0 0.0
    %390 = vmatprep.subr.mxu0 0.0
    %391 = vmatpush1.xpose.msra.mxu0 0.0
    %392 = vmatprep.subr.mxu0 0.0
    %393 = vmatpush1.xpose.msra.mxu0 0.0
    %394 = vmatprep.subr.mxu0 0.0
    %395 = vmatpush1.xpose.msra.mxu0 0.0
    %396 = vmatprep.mubr.f32.mxu0 0.0
    %397 = vmatmul.mubr.f32.gmra.mrb[0].mxu0 %v321
    %v398 = vpop.f32.mrb[0].mxu0
    %v399 = vadd.f32 %v331, %v398
    %v400 = vpop.f32.mrb[0].mxu0
    %401 = vdwg.mxu0
    %vm402 = vcmask 57344
    %403 = vst.msk [vmem:[#allocation8] sm:$0x1] %vm402, %v399
    // Predicated region
    $region46: #{tpu_custom_call.1} parent=1 // pred_check
      _
    $region47: #{tpu_custom_call.1} parent=1 // pred_check_branch
      %405 = sbr.rel (0) target = $region49
    $region48: #{tpu_custom_call.1} parent=1 // pred_region
      %s407 = ssub.s32 16, 16
      %408 = vsyncadd [#allocation5], %s407
      %s410 = sshll.u32 [#allocation8], 4
      %s411 = int_to_ptr.vmem [resolvable:$true] %s410
      %413 = dma.vmem_to_hbm [thread:$0]  %s411, 16, %s9, [#allocation5]
    $region49: #{tpu_custom_call.1} parent=1 // pred_fallthru
      _
    // Predicated region
    $region50: #{tpu_custom_call.1} parent=1 // pred_check
      _
    $region51: #{tpu_custom_call.1} parent=1 // pred_check_branch
      %415 = sbr.rel (0) target = $region53
    $region52: #{tpu_custom_call.1} parent=1 // pred_region
      %416 = dma.done [#allocation5], 16
    $region53: #{tpu_custom_call.1} parent=1 // pred_fallthru
      _
    %417 = vsyncpa [#allocation4], 1
    %418 = vsyncpa [#allocation7], 1
    %419 = vsyncpa [#allocation5], 1

</llo_original>
